<compile_context>
chip_gen: v7x
topology: tpu7x:2x2x1
jax: 0.10.0
libtpu: 0.0.40
codegen_flags: <defaults>
</compile_context>

<pallas_src>
import functools

import jax
import jax.numpy as jnp
from jax import lax
from jax.experimental import pallas as pl
from jax.experimental.pallas import tpu as pltpu


# ----------------------------------------------------------------------------
# Counter-based hash for in-kernel dropout (murmur3-style finalizer on int32).
# ----------------------------------------------------------------------------
def _as_i32(x):
    """Python int -> two's-complement int32 value."""
    x &= 0xFFFFFFFF
    return x - (1 << 32) if x >= (1 << 31) else x


_MIX_A = _as_i32(0x9E3779B1)   # golden-ratio increment (row mixing)
_MIX_B = _as_i32(0x7FEB352D)   # column mixing
_MIX_C = _as_i32(0x85EBCA6B)   # murmur3 finalizer constants
_MIX_D = _as_i32(0xC2B2AE35)


def _uniform24(seed, row_idx, col_idx):
    """Hash (seed, row, col) -> int32 in [0, 2**24). Pure jnp/lax integer ops."""
    h = seed ^ (row_idx * jnp.int32(_MIX_A)) ^ (col_idx * jnp.int32(_MIX_B))
    h = h ^ lax.shift_right_logical(h, jnp.int32(16))
    h = h * jnp.int32(_MIX_C)
    h = h ^ lax.shift_right_logical(h, jnp.int32(13))
    h = h * jnp.int32(_MIX_D)
    h = h ^ lax.shift_right_logical(h, jnp.int32(16))
    return lax.shift_right_logical(h, jnp.int32(8))   # top 24 bits, non-negative


def _apply_dropout(vals, seed, row_idx, col_idx, rate):
    """Element-wise inverted dropout (matches nn.Dropout forward in training)."""
    if rate >= 1.0:
        return jnp.zeros_like(vals)
    r = _uniform24(seed, row_idx, col_idx)
    thresh = jnp.int32(int(round(rate * (1 << 24))))
    scale = jnp.float32(1.0 / (1.0 - rate))
    return jnp.where(r >= thresh, vals * scale, jnp.float32(0.0))


# ----------------------------------------------------------------------------
# Fast path: VMEM-resident table, T tokens per grid step, one-hot MXU gather.
# ----------------------------------------------------------------------------
def _embedding_block_kernel(seed_ref, ids_ref, table_ref, out_ref, *,
                            tokens_per_block, rate, training):
    T = tokens_per_block
    table = table_ref[...]                              # (V, D), VMEM-resident
    V = table.shape[0]
    D = table.shape[1]

    ids = ids_ref[0]                                    # (T, 1) int32 (sublanes)
    # Gather via one-hot matmul on the MXU.
    onehot = jnp.where(ids == lax.broadcasted_iota(jnp.int32, (T, V), 1),
                       jnp.float32(1.0), jnp.float32(0.0)).astype(table.dtype)
    vals = jnp.dot(onehot, table, preferred_element_type=jnp.float32)   # (T, D)

    if training and rate > 0.0:
        row0 = pl.program_id(0) * T
        row = row0 + lax.broadcasted_iota(jnp.int32, (T, D), 0)  # absolute token
        col = lax.broadcasted_iota(jnp.int32, (T, D), 1)
        vals = _apply_dropout(vals, seed_ref[0], row, col, rate)

    out_ref[...] = vals.astype(out_ref.dtype)


# ----------------------------------------------------------------------------
# Fallback path (huge vocab): per-row gather via scalar-prefetched ids.
# TODO(synk): replace with a batched, manually double-buffered make_async_copy
#             gather over id blocks when the table does not fit in VMEM.
# ----------------------------------------------------------------------------
def _embedding_row_kernel(ids_ref, seed_ref, row_ref, out_ref, *,
                          rate, training, embed_dim):
    del ids_ref                                  # used only by the index_map
    vals = row_ref[...].astype(jnp.float32)      # (1, D) gathered row

    if training and rate > 0.0:
        row = pl.program_id(0)                   # absolute token index
        col = lax.broadcasted_iota(jnp.int32, (1, embed_dim), 1)
        vals = _apply_dropout(vals, seed_ref[0], row, col, rate)

    out_ref[...] = vals.astype(out_ref.dtype)


# ----------------------------------------------------------------------------
# Wrapper
# ----------------------------------------------------------------------------
_TABLE_VMEM_BUDGET = 40 * (1 << 20)   # conservative across v5e/v6e/v7x (64 MiB VMEM)
_MAX_ONEHOT_VOCAB = 2048              # keep the (T, V) one-hot tile small


def _round_up(x, m):
    return ((x + m - 1) // m) * m


def embedding_forward(inputs, embedding_matrix, *, word_dropout_rate=0.0,
                      training=False, seed=0):
    """Pallas equivalent of Embedding.forward (lookup + dropout)."""
    V, D = embedding_matrix.shape
    in_shape = inputs.shape
    ids_flat = jnp.asarray(inputs).reshape(-1).astype(jnp.int32)
    N = int(ids_flat.shape[0])
    seed_arr = jnp.asarray([seed], dtype=jnp.int32)

    table_bytes = V * D * embedding_matrix.dtype.itemsize
    use_resident = (table_bytes <= _TABLE_VMEM_BUDGET) and (V <= _MAX_ONEHOT_VOCAB)

    if use_resident:
        # Token block: multiple of 8 (16 for bf16) so output stores are sublane-dense.
        T = min(256, _round_up(max(N, 1), 8))
        if embedding_matrix.dtype == jnp.bfloat16:
            T = _round_up(T, 16)
        num_blocks = (N + T - 1) // T
        n_pad = num_blocks * T
        ids_pad = jnp.pad(ids_flat, (0, n_pad - N)).reshape(num_blocks, T, 1)

        kernel = functools.partial(
            _embedding_block_kernel, tokens_per_block=T,
            rate=float(word_dropout_rate), training=bool(training))

        grid_spec = pltpu.PrefetchScalarGridSpec(
            num_scalar_prefetch=1,                       # seed -> SMEM
            grid=(num_blocks,),
            in_specs=[
                pl.BlockSpec((1, T, 1), lambda i, seed: (i, 0, 0)),   # ids block
                pl.BlockSpec((V, D), lambda i, seed: (0, 0)),         # resident table
            ],
            out_specs=pl.BlockSpec((T, D), lambda i, seed: (i, 0)),
        )
        vmem_limit = int(min(64 << 20,
                             max(32 << 20, table_bytes + 8 * T * D * 4 + (4 << 20))))
        out_flat = pl.pallas_call(
            kernel,
            out_shape=jax.ShapeDtypeStruct((n_pad, D), embedding_matrix.dtype),
            grid_spec=grid_spec,
            compiler_params=pltpu.CompilerParams(
                dimension_semantics=("parallel",),        # independent token blocks
                vmem_limit_bytes=vmem_limit,
            ),
        )(seed_arr, ids_pad, embedding_matrix)
        out_flat = out_flat[:N]
    else:
        kernel = functools.partial(
            _embedding_row_kernel, rate=float(word_dropout_rate),
            training=bool(training), embed_dim=D)
        grid_spec = pltpu.PrefetchScalarGridSpec(
            num_scalar_prefetch=2,                       # ids + seed -> SMEM
            grid=(N,),
            in_specs=[
                pl.BlockSpec((1, D), lambda i, ids, s: (ids[i], 0),
                             pipeline_mode=pl.Buffered(4)),
            ],
            out_specs=pl.BlockSpec((1, D), lambda i, ids, s: (i, 0)),
        )
        out_flat = pl.pallas_call(
            kernel,
            out_shape=jax.ShapeDtypeStruct((N, D), embedding_matrix.dtype),
            grid_spec=grid_spec,
            compiler_params=pltpu.CompilerParams(
                dimension_semantics=("arbitrary",)),
        )(ids_flat, seed_arr, embedding_matrix)

    return out_flat.reshape(*in_shape, D)


if __name__ == "__main__":
    # Small deterministic shapes consistent with the module.
    V, D = 64, 128          # vocab_size, input_size (embedding dim)
    B, S = 2, 8             # batch, sequence length
    word_dropout_rate = 0.1
    # padding_idx / isTrainEmbedding only affect gradients, not the forward pass.

    key = jax.random.PRNGKey(0)
    k_emb, k_ids = jax.random.split(key)
    embedding_matrix = jax.random.normal(k_emb, (V, D), dtype=jnp.float32)
    inputs = jax.random.randint(k_ids, (B, S), 0, V, dtype=jnp.int32)

    ref = jnp.take(embedding_matrix, inputs, axis=0)

    # Eval mode (dropout = identity) must match a plain gather exactly.
    out_eval = embedding_forward(
        inputs, embedding_matrix, word_dropout_rate=word_dropout_rate, training=False)
    out_eval = jax.block_until_ready(out_eval)
    assert out_eval.shape == (B, S, D)
    assert jnp.allclose(out_eval, ref, atol=1e-6), "eval-mode mismatch vs reference gather"

    # Training mode: every element must be either 0 or row_value / (1 - p).
    out_train = embedding_forward(
        inputs, embedding_matrix, word_dropout_rate=word_dropout_rate,
        training=True, seed=42)
    out_train = jax.block_until_ready(out_train)
    assert out_train.shape == (B, S, D)
    scale = 1.0 / (1.0 - word_dropout_rate)
    kept = jnp.isclose(out_train, ref * scale, rtol=1e-5, atol=1e-5)
    dropped = (out_train == 0.0)
    assert bool(jnp.all(kept | dropped)), "training-mode values are not {0, row*scale}"
    drop_frac = float(jnp.mean(dropped.astype(jnp.float32)))
    assert 0.0 < drop_frac < 0.6, f"implausible dropout fraction {drop_frac}"

    print("KERNEL_OK")
</pallas_src>

<mosaic_0001>
module attributes {stable_mosaic.version = 11 : i64} {
  func.func @_embedding_block_kernel(%arg0: i32, %arg1: memref<1xi32, #tpu.memory_space<smem>>, %arg2: memref<1x16x1xi32, #tpu.memory_space<vmem>>, %arg3: memref<64x128xf32, #tpu.memory_space<vmem>>, %arg4: memref<16x128xf32, #tpu.memory_space<vmem>>) attributes {dimension_semantics = [#tpu.dimension_semantics<parallel>], iteration_bounds = array<i64: 1>, scalar_prefetch = 1 : i64, scratch_operands = 0 : i64, tpu.core_type = #tpu.core_type<tc>, window_params = [{transform_indices = @transform_0, window_bounds = array<i64: 1, 16, 1>}, {pipeline_mode = #tpu.pipeline_mode<synchronous>, transform_indices = @transform_1, window_bounds = array<i64: 64, 128>}, {transform_indices = @transform_2, window_bounds = array<i64: 16, 128>}]} {
    %c0 = arith.constant 0 : index
    %c0_0 = arith.constant 0 : index
    %0 = vector.load %arg3[%c0, %c0_0] : memref<64x128xf32, #tpu.memory_space<vmem>>, vector<64x128xf32>
    %c0_1 = arith.constant 0 : index
    %c0_2 = arith.constant 0 : index
    %c0_3 = arith.constant 0 : index
    %1 = vector.load %arg2[%c0_1, %c0_2, %c0_3] : memref<1x16x1xi32, #tpu.memory_space<vmem>>, vector<1x16x1xi32>
    %2 = vector.shape_cast %1 : vector<1x16x1xi32> to vector<16x1xi32>
    %3 = tpu.iota {dimensions = array<i32: 1>} : vector<16x64xi32>
    %4 = vector.broadcast %2 : vector<16x1xi32> to vector<16x64xi32>
    %5 = arith.cmpi eq, %4, %3 : vector<16x64xi32>
    %cst = arith.constant 1.000000e+00 : f32
    %cst_4 = arith.constant 0.000000e+00 : f32
    %6 = vector.broadcast %cst : f32 to vector<16x64xf32>
    %7 = vector.broadcast %cst_4 : f32 to vector<16x64xf32>
    %8 = arith.select %5, %6, %7 : vector<16x64xi1>, vector<16x64xf32>
    %cst_5 = arith.constant dense<0.000000e+00> : vector<16x128xf32>
    %9 = tpu.matmul %8, %0, %cst_5 {dimension_numbers = #tpu.dot_dimension_numbers<[1], [0], [0], [1], [0, 0, 1, 1], [], []>} : vector<16x64xf32>, vector<64x128xf32>, vector<16x128xf32> -> vector<16x128xf32>
    %c0_6 = arith.constant 0 : index
    %c0_7 = arith.constant 0 : index
    %10 = vector.load %arg4[%c0_6, %c0_7] : memref<16x128xf32, #tpu.memory_space<vmem>>, vector<16x128xf32>
    tpu.vector_store %arg4[%c0_6, %c0_7], %9 {strides = array<i32>} : memref<16x128xf32, #tpu.memory_space<vmem>>, vector<16x128xf32>,
    return
  }
  func.func @transform_0(%arg0: i32, %arg1: memref<1xi32, #tpu.memory_space<smem>>) -> (i32, i32, i32) {
    %c0_i32 = arith.constant 0 : i32
    %c0_i32_0 = arith.constant 0 : i32
    %c0_i32_1 = arith.constant 0 : i32
    return %arg0, %c0_i32, %c0_i32_0 : i32, i32, i32
  }
  func.func @transform_1(%arg0: i32, %arg1: memref<1xi32, #tpu.memory_space<smem>>) -> (i32, i32) {
    %c0_i32 = arith.constant 0 : i32
    %c0_i32_0 = arith.constant 0 : i32
    %c0_i32_1 = arith.constant 0 : i32
    return %c0_i32, %c0_i32_0 : i32, i32
  }
  func.func @transform_2(%arg0: i32, %arg1: memref<1xi32, #tpu.memory_space<smem>>) -> (i32, i32) {
    %c0_i32 = arith.constant 0 : i32
    %c0_i32_0 = arith.constant 0 : i32
    return %arg0, %c0_i32 : i32, i32
  }
}

</mosaic_0001>

<llo_original>
// kernel: tpu_custom_call.1
$region0: #{tpu_custom_call.1}
  #allocation0 [shape = 'u32[]', space=smem, size = 0x4, offset = 0x4, fixed_abs, tag = 'smem constant byte address 0x4 - core index']
  #allocation1 [shape = 'u32[144,128]{1,0:T(1,128)}', space=vmem, size = 0x12000, scoped, tag = 'internal scratch']
  #allocation2 [shape = 's32[1]{0}', space=sflag, size = 0x4, scoped, tag = 'scoped memory for tpu_custom_call.1']
  #allocation3 [shape = 's32[1]{0:T(128)S(6)}', space=smem, size = 0x200, scoped, tag = 'prefetched SMEM operand 0']
  %s0 = inlined_call_operand.<no memory space> [shape: s32[1], index: 0, kind: input, shape index: {}]
  %s1 = inlined_call_operand.vmem [shape: s32[1,16,1], index: 1, kind: input, shape index: {}]
  %s2 = inlined_call_operand.hbm [shape: f32[64,128], index: 2, kind: input, shape index: {}]
  %s3 = inlined_call_operand.hbm [shape: f32[16,128], index: 3, kind: output, shape index: {}]
  %s4 = sld [smem:[#allocation0]]
  $region22: #{tpu_custom_call.1} parent=0
    _
  %s6 = ssub.s32 1, %s4
  %s7 = scalar_select 0, %s6, %s4
  %8 = sst [smem:[#allocation3]] %s0
  $region1: #{tpu_custom_call.1} parent=0
    #allocation4 [shape = 'u8[32768]{0}', space=vmem, size = 0x8000, scoped, tag = 'input window, operand 2, single buffered']
    #allocation5 [shape = 's32[1]{0}', space=sflag, size = 0x4, scoped, tag = 'scoped memory for tpu_custom_call.1']
    #allocation6 [shape = 's32[1]{0}', space=sflag, size = 0x4, scoped, tag = 'scoped memory for tpu_custom_call.1']
    #allocation7 [shape = 'u8[8192]{0}', space=vmem, size = 0x2000, scoped, tag = 'output window, operand 0, single buffered']
    %9 = vsyncpa [#allocation5], 0
    %10 = vsyncpa [#allocation6], 0
    // Predicated region
    $region2: #{tpu_custom_call.1} parent=1 // pred_check
      _
    $region3: #{tpu_custom_call.1} parent=1 // pred_check_branch
      %12 = sbr.rel (0) target = $region5
    $region4: #{tpu_custom_call.1} parent=1 // pred_region
      _
    $region5: #{tpu_custom_call.1} parent=1 // pred_fallthru
      _
    // Predicated region
    $region6: #{tpu_custom_call.1} parent=1 // pred_check
      _
    $region7: #{tpu_custom_call.1} parent=1 // pred_check_branch
      %14 = sbr.rel (0) target = $region9
    $region8: #{tpu_custom_call.1} parent=1 // pred_region
      %s16 = ssub.s32 1024, 1024
      %17 = vsyncadd [#allocation5], %s16
      %s18 = sshll.u32 [#allocation4], 4
      %s19 = int_to_ptr.vmem [resolvable:$true] %s18
      %24 = dma.hbm_to_vmem [thread:$0]  %s2, 1024, %s19, [#allocation5], 128, 128, 8
    $region9: #{tpu_custom_call.1} parent=1 // pred_fallthru
      _
    // Predicated region
    $region10: #{tpu_custom_call.1} parent=1 // pred_check
      _
    $region11: #{tpu_custom_call.1} parent=1 // pred_check_branch
      %26 = sbr.rel (0) target = $region13
    $region12: #{tpu_custom_call.1} parent=1 // pred_region
      %27 = dma.done [#allocation5], 1024
    $region13: #{tpu_custom_call.1} parent=1 // pred_fallthru
      _
    %v28 = vld [vmem:[#allocation4] sm:$0xff]
    %v29 = vld [vmem:[#allocation4 + $0x8] sm:$0xff]
    %v30 = vld [vmem:[#allocation4 + $0x10] sm:$0xff]
    %v31 = vld [vmem:[#allocation4 + $0x18] sm:$0xff]
    %v32 = vld [vmem:[#allocation4 + $0x20] sm:$0xff]
    %v33 = vld [vmem:[#allocation4 + $0x28] sm:$0xff]
    %v34 = vld [vmem:[#allocation4 + $0x30] sm:$0xff]
    %v35 = vld [vmem:[#allocation4 + $0x38] sm:$0xff]
    %v36 = vld [vmem:[%s1] sm:$0xff]
    %v37 = vld [vmem:[%s1 + $0x8] sm:$0xff]
    %v38 = vlaneseq
    %v39 = vand.u32 %v38, 127
    %40 = vset.pattern.permute.xlu0 0
    %41 = vperm.xlu0 %40, %v36
    %v42 = vpop.permute.xlu0 %41
    %43 = vset.pattern.permute.xlu0 0
    %44 = vperm.xlu0 %43, %v37
    %v45 = vpop.permute.xlu0 %44
    %vm46 = vcmp.eq.s32.totalorder %v42, %v39
    %vm47 = vcmp.eq.s32.totalorder %v45, %v39
    %v48 = vsel %vm46, 1.0, 0.0
    %v49 = vsel %vm47, 1.0, 0.0
    %vm50 = vcmask 523264
    %v52 = vsel %vm50, %v48, 0
    %v55 = vsel %vm50, %v49, 0
    %57 = vmatprep.subr.mxu0 0.0
    %58 = vmatpush1.msra.mxu0 %v28
    %59 = vmatprep.subr.mxu0 0.0
    %60 = vmatpush1.msra.mxu0 %v29
    %61 = vmatprep.subr.mxu0 0.0
    %62 = vmatpush1.msra.mxu0 %v30
    %63 = vmatprep.subr.mxu0 0.0
    %64 = vmatpush1.msra.mxu0 %v31
    %65 = vmatprep.subr.mxu0 0.0
    %66 = vmatpush1.msra.mxu0 %v32
    %67 = vmatprep.subr.mxu0 0.0
    %68 = vmatpush1.msra.mxu0 %v33
    %69 = vmatprep.subr.mxu0 0.0
    %70 = vmatpush1.msra.mxu0 %v34
    %71 = vmatprep.subr.mxu0 0.0
    %72 = vmatpush1.msra.mxu0 %v35
    %73 = vmatprep.subr.mxu0 0.0
    %74 = vmatpush1.msra.mxu0 0.0
    %75 = vmatprep.subr.mxu0 0.0
    %76 = vmatpush1.msra.mxu0 0.0
    %77 = vmatprep.subr.mxu0 0.0
    %78 = vmatpush1.msra.mxu0 0.0
    %79 = vmatprep.subr.mxu0 0.0
    %80 = vmatpush1.msra.mxu0 0.0
    %81 = vmatprep.subr.mxu0 0.0
    %82 = vmatpush1.msra.mxu0 0.0
    %83 = vmatprep.subr.mxu0 0.0
    %84 = vmatpush1.msra.mxu0 0.0
    %85 = vmatprep.subr.mxu0 0.0
    %86 = vmatpush1.msra.mxu0 0.0
    %87 = vmatprep.subr.mxu0 0.0
    %88 = vmatpush1.msra.mxu0 0.0
    %89 = vmatprep.subr.mxu0 0.0
    %90 = vmatpush1.msra.mxu0 0.0
    %91 = vmatprep.subr.mxu0 0.0
    %92 = vmatpush1.msra.mxu0 0.0
    %93 = vmatprep.subr.mxu0 0.0
    %94 = vmatpush1.msra.mxu0 0.0
    %95 = vmatprep.subr.mxu0 0.0
    %96 = vmatpush1.msra.mxu0 0.0
    %97 = vmatprep.subr.mxu0 0.0
    %98 = vmatpush1.msra.mxu0 0.0
    %99 = vmatprep.subr.mxu0 0.0
    %100 = vmatpush1.msra.mxu0 0.0
    %101 = vmatprep.subr.mxu0 0.0
    %102 = vmatpush1.msra.mxu0 0.0
    %103 = vmatprep.subr.mxu0 0.0
    %104 = vmatpush1.msra.mxu0 0.0
    %105 = vmatprep.subr.mxu0 0.0
    %106 = vmatpush1.msra.mxu0 0.0
    %107 = vmatprep.subr.mxu0 0.0
    %108 = vmatpush1.msra.mxu0 0.0
    %109 = vmatprep.subr.mxu0 0.0
    %110 = vmatpush1.msra.mxu0 0.0
    %111 = vmatprep.subr.mxu0 0.0
    %112 = vmatpush1.msra.mxu0 0.0
    %113 = vmatprep.subr.mxu0 0.0
    %114 = vmatpush1.msra.mxu0 0.0
    %115 = vmatprep.subr.mxu0 0.0
    %116 = vmatpush1.msra.mxu0 0.0
    %117 = vmatprep.subr.mxu0 0.0
    %118 = vmatpush1.msra.mxu0 0.0
    %119 = vmatprep.subr.mxu0 0.0
    %120 = vmatpush1.msra.mxu0 0.0
    %121 = vmatprep.mubr.f32.mxu0 0.0
    %122 = vmatmul.mubr.f32.gmra.mrb[0].mxu0 %v52
    %v123 = vpop.f32.mrb[0].mxu0
    %v124 = vadd.f32 0.0, %v123
    %v125 = vpop.f32.mrb[0].mxu0
    %126 = vmatprep.mubr.f32.mxu0 0.0
    %127 = vmatmul.mubr.f32.gmra.mrb[0].mxu0 %v55
    %v128 = vpop.f32.mrb[0].mxu0
    %v129 = vadd.f32 0.0, %v128
    %v130 = vpop.f32.mrb[0].mxu0
    %131 = vdwg.mxu0
    %132 = vst [vmem:[#allocation7] sm:$0xff] %v124
    %133 = vst [vmem:[#allocation7 + $0x8] sm:$0xff] %v129
    // Predicated region
    $region14: #{tpu_custom_call.1} parent=1 // pred_check
      _
    $region15: #{tpu_custom_call.1} parent=1 // pred_check_branch
      %135 = sbr.rel (0) target = $region17
    $region16: #{tpu_custom_call.1} parent=1 // pred_region
      %s137 = ssub.s32 256, 256
      %138 = vsyncadd [#allocation6], %s137
      %s139 = sshll.u32 [#allocation7], 4
      %s140 = int_to_ptr.vmem [resolvable:$true] %s139
      %145 = dma.vmem_to_hbm [thread:$0]  %s140, 256, %s3, [#allocation6], 128, 128, 8
    $region17: #{tpu_custom_call.1} parent=1 // pred_fallthru
      _
    // Predicated region
    $region18: #{tpu_custom_call.1} parent=1 // pred_check
      _
    $region19: #{tpu_custom_call.1} parent=1 // pred_check_branch
      %147 = sbr.rel (0) target = $region21
    $region20: #{tpu_custom_call.1} parent=1 // pred_region
      %148 = dma.done [#allocation6], 256
    $region21: #{tpu_custom_call.1} parent=1 // pred_fallthru
      _
    %149 = vsyncpa [#allocation5], 1
    %150 = vsyncpa [#allocation6], 1

</llo_original>
